<compile_context>
chip_gen: v5e
topology: v5e:2x2
jax: 0.10.0
libtpu: 0.0.40
codegen_flags: <defaults>
</compile_context>

<pallas_src>
import math

import numpy as np
import jax
import jax.numpy as jnp
from jax.experimental import pallas as pl
from jax.experimental.pallas import tpu as pltpu


# ---------------------------------------------------------------------------
# Pallas kernel: one ROI per grid step.
# ---------------------------------------------------------------------------
def _roi_align_kernel(idx_ref, feat_ref, ay_ref, axt_ref, out_ref):
    # idx_ref is the scalar-prefetch array; it is only consumed by the index_maps.
    del idx_ref
    feat = feat_ref[0]          # (C, H_pad, W_pad)
    a_y = ay_ref[0]             # (P_pad, H_pad)
    a_xt = axt_ref[0]           # (W_pad, P_pad)

    c, h, w = feat.shape
    pp = a_y.shape[0]

    # x-contraction on the MXU: (C*H, W) @ (W, P_pad) -> (C*H, P_pad)
    m = jnp.dot(feat.reshape(c * h, w), a_xt, preferred_element_type=jnp.float32)
    m = m.reshape(c, h, pp)

    # y-contraction, batched over channels: (C, P_pad, H) x (C, H, P_pad) -> (C, P_pad, P_pad)
    a_y_b = jnp.broadcast_to(a_y[None, :, :], (c, pp, h))
    out = jax.lax.dot_general(
        a_y_b, m,
        dimension_numbers=(((2,), (1,)), ((0,), (0,))),
        preferred_element_type=jnp.float32)

    out_ref[0] = out.astype(out_ref.dtype)


# ---------------------------------------------------------------------------
# Wrapper helpers (pure JAX, elementwise only).
# ---------------------------------------------------------------------------
def _round_up(x, m):
    return (x + m - 1) // m * m


def _map_levels(boxes, k_min, k_max, canonical_level=4.0, canonical_scale=224.0, eps=1e-6):
    """Standard FPN LevelMapper: box -> index into filter_level."""
    area = (boxes[:, 2] - boxes[:, 0]) * (boxes[:, 3] - boxes[:, 1])
    s = jnp.sqrt(jnp.maximum(area, 0.0))
    lvl = jnp.floor(canonical_level + jnp.log2(s / canonical_scale + eps))
    lvl = jnp.clip(lvl, k_min, k_max)
    return (lvl - k_min).astype(jnp.int32)


def _interp_matrix(start, bin_size, size_per_roi, padded_size, pooled, samples):
    """Per-ROI 1-D ROI-Align interpolation/averaging matrix, shape (N, pooled, padded_size)."""
    p = jnp.arange(pooled, dtype=jnp.float32)
    s = jnp.arange(samples, dtype=jnp.float32)
    # Sample coordinates, (N, pooled, samples).
    coord = (start[:, None, None]
             + p[None, :, None] * bin_size[:, None, None]
             + (s[None, None, :] + 0.5) * bin_size[:, None, None] / samples)
    size = size_per_roi[:, None, None]

    valid = (coord >= -1.0) & (coord <= size)
    cc = jnp.maximum(coord, 0.0)
    low0 = jnp.floor(cc)
    at_edge = low0 >= size - 1.0
    low = jnp.where(at_edge, size - 1.0, low0)
    high = jnp.where(at_edge, size - 1.0, low0 + 1.0)
    cc = jnp.where(at_edge, size - 1.0, cc)
    lw = cc - low          # weight on `high`
    hw = 1.0 - lw          # weight on `low`

    idx = jnp.arange(padded_size, dtype=jnp.int32)
    low_i = low.astype(jnp.int32)[..., None]
    high_i = high.astype(jnp.int32)[..., None]
    w = (hw[..., None] * (idx == low_i).astype(jnp.float32)
         + lw[..., None] * (idx == high_i).astype(jnp.float32))
    w = jnp.where(valid[..., None], w, 0.0)
    return w.mean(axis=2)  # average over sampling points -> (N, pooled, padded_size)


# ---------------------------------------------------------------------------
# MultiROIPool forward.
# ---------------------------------------------------------------------------
def multi_roi_pool(xs, proposals, strides, filter_level=None, output_size=7,
                   sampling_ratio=2, canonical_level=4.0, canonical_scale=224.0):
    """xs: list of (B, C, H_l, W_l) FPN maps; proposals: list (len B) of (n_i, 4) boxes."""
    if filter_level is None:
        filter_level = [0, 1, 2, 3]
    scales = [1.0 / float(strides[i]) for i in filter_level]
    feature_level = [math.log2(1.0 / sc) for sc in scales]
    k_min, k_max = feature_level[0], feature_level[-1]

    feats = [xs[i] for i in filter_level]
    num_b, num_c = feats[0].shape[0], feats[0].shape[1]
    num_l = len(feats)
    p_out = output_size
    samp = sampling_ratio
    dtype = feats[0].dtype

    hs = [f.shape[2] for f in feats]
    ws = [f.shape[3] for f in feats]
    h_pad = _round_up(max(hs), 8)
    w_pad = _round_up(max(ws), 8)
    p_pad = _round_up(p_out, 8)

    # Stack all levels (zero padded) into (L*B, C, H_pad, W_pad); flat index = level*B + b.
    padded = [jnp.pad(f, ((0, 0), (0, 0), (0, h_pad - f.shape[2]), (0, w_pad - f.shape[3])))
              for f in feats]
    feat_stack = jnp.stack(padded, axis=0).reshape(num_l * num_b, num_c, h_pad, w_pad)

    # ROI format: concatenated boxes + per-box batch index (== convert_to_roi_format).
    boxes = jnp.concatenate(proposals, axis=0).astype(jnp.float32)     # (N, 4)
    batch_idx = jnp.concatenate(
        [jnp.full((pr.shape[0],), i, dtype=jnp.int32) for i, pr in enumerate(proposals)])
    n_roi = boxes.shape[0]

    # Level routing + per-ROI geometry (aligned=False roi_align semantics).
    level = _map_levels(boxes, k_min, k_max, canonical_level, canonical_scale)
    scale_r = jnp.asarray(scales, jnp.float32)[level]
    h_r = jnp.asarray(hs, jnp.float32)[level]
    w_r = jnp.asarray(ws, jnp.float32)[level]

    x1 = boxes[:, 0] * scale_r
    y1 = boxes[:, 1] * scale_r
    x2 = boxes[:, 2] * scale_r
    y2 = boxes[:, 3] * scale_r
    roi_w = jnp.maximum(x2 - x1, 1.0)
    roi_h = jnp.maximum(y2 - y1, 1.0)
    bin_h = roi_h / p_out
    bin_w = roi_w / p_out

    a_y = _interp_matrix(y1, bin_h, h_r, h_pad, p_out, samp)           # (N, P, H_pad)
    a_x = _interp_matrix(x1, bin_w, w_r, w_pad, p_out, samp)           # (N, P, W_pad)
    a_y = jnp.pad(a_y, ((0, 0), (0, p_pad - p_out), (0, 0))).astype(jnp.float32)
    a_xt = jnp.pad(a_x, ((0, 0), (0, p_pad - p_out), (0, 0))).transpose(0, 2, 1)
    a_xt = a_xt.astype(jnp.float32)                                    # (N, W_pad, P_pad)

    flat_idx = (level * num_b + batch_idx).astype(jnp.int32)

    # Sort ROIs by feature-block index so consecutive grid steps reuse the resident block.
    order = jnp.argsort(flat_idx)
    inv_order = jnp.argsort(order)

    flops = 2 * n_roi * num_c * (h_pad * w_pad * p_pad + h_pad * p_pad * p_pad)
    bytes_accessed = 4 * (n_roi * num_c * h_pad * w_pad
                          + n_roi * p_pad * (h_pad + w_pad)
                          + n_roi * num_c * p_pad * p_pad)

    grid_spec = pltpu.PrefetchScalarGridSpec(
        num_scalar_prefetch=1,                       # flat (level, batch) index per ROI
        grid=(n_roi,),                               # one ROI per grid step (pipelined DMA)
        in_specs=[
            pl.BlockSpec((1, num_c, h_pad, w_pad),
                         lambda i, idx_ref: (idx_ref[i], 0, 0, 0)),
            pl.BlockSpec((1, p_pad, h_pad), lambda i, idx_ref: (i, 0, 0)),
            pl.BlockSpec((1, w_pad, p_pad), lambda i, idx_ref: (i, 0, 0)),
        ],
        out_specs=pl.BlockSpec((1, num_c, p_pad, p_pad),
                               lambda i, idx_ref: (i, 0, 0, 0)),
    )

    out_padded = pl.pallas_call(
        _roi_align_kernel,
        grid_spec=grid_spec,
        out_shape=jax.ShapeDtypeStruct((n_roi, num_c, p_pad, p_pad), dtype),
        compiler_params=pltpu.CompilerParams(dimension_semantics=("parallel",)),
        cost_estimate=pl.CostEstimate(flops=flops, transcendentals=0,
                                      bytes_accessed=bytes_accessed),
    )(flat_idx[order], feat_stack, a_y[order], a_xt[order])

    # Undo the sort and strip the pooled-dim padding.
    return out_padded[inv_order][:, :, :p_out, :p_out]


# ---------------------------------------------------------------------------
# Pure numpy reference (direct transcription of torchvision roi_align, aligned=False).
# ---------------------------------------------------------------------------
def _roi_align_ref_np(feat, box, scale, pooled, samples):
    feat = np.asarray(feat, np.float32)                 # (C, H, W)
    c, h, w = feat.shape
    x1, y1, x2, y2 = [float(v) * scale for v in np.asarray(box, np.float32)]
    roi_w = max(x2 - x1, 1.0)
    roi_h = max(y2 - y1, 1.0)
    bin_h = roi_h / pooled
    bin_w = roi_w / pooled
    out = np.zeros((c, pooled, pooled), np.float32)
    for py in range(pooled):
        for px in range(pooled):
            acc = np.zeros((c,), np.float32)
            for iy in range(samples):
                y = y1 + py * bin_h + (iy + 0.5) * bin_h / samples
                for ix in range(samples):
                    x = x1 + px * bin_w + (ix + 0.5) * bin_w / samples
                    if y < -1.0 or y > h or x < -1.0 or x > w:
                        continue
                    yy = max(y, 0.0)
                    xx = max(x, 0.0)
                    y_lo = int(yy)
                    x_lo = int(xx)
                    if y_lo >= h - 1:
                        y_hi = y_lo = h - 1
                        yy = float(y_lo)
                    else:
                        y_hi = y_lo + 1
                    if x_lo >= w - 1:
                        x_hi = x_lo = w - 1
                        xx = float(x_lo)
                    else:
                        x_hi = x_lo + 1
                    ly = yy - y_lo
                    lx = xx - x_lo
                    hy = 1.0 - ly
                    hx = 1.0 - lx
                    acc += (hy * hx * feat[:, y_lo, x_lo] + hy * lx * feat[:, y_lo, x_hi]
                            + ly * hx * feat[:, y_hi, x_lo] + ly * lx * feat[:, y_hi, x_hi])
            out[:, py, px] = acc / float(samples * samples)
    return out


if __name__ == "__main__":
    key = jax.random.PRNGKey(0)
    num_b, num_c = 2, 4
    strides = [4, 8, 16, 32, 64]
    filter_level = [0, 1, 2, 3]
    output_size, sampling_ratio = 7, 2
    img = 256
    sizes = [img // s for s in strides]                 # [64, 32, 16, 8, 4]

    keys = jax.random.split(key, len(strides))
    xs = [jax.random.normal(k, (num_b, num_c, sz, sz), jnp.float32)
          for k, sz in zip(keys, sizes)]

    # Deterministic proposals spanning several FPN levels (last one extends off-image to
    # exercise the out-of-range / edge-clamp paths of roi_align).
    proposals = [
        jnp.array([[10.0, 12.0, 52.0, 50.0],
                   [30.0, 20.0, 150.0, 140.0],
                   [5.0, 8.0, 245.0, 248.0],
                   [100.0, 110.0, 130.0, 126.0]], dtype=jnp.float32),
        jnp.array([[0.0, 0.0, 60.0, 44.0],
                   [20.0, 64.0, 250.0, 200.0],
                   [40.0, 30.0, 48.0, 62.0],
                   [200.0, 180.0, 260.0, 256.0]], dtype=jnp.float32),
    ]

    out = multi_roi_pool(xs, proposals, strides, filter_level,
                         output_size=output_size, sampling_ratio=sampling_ratio)
    out = jax.block_until_ready(out)

    # Reference: level routing (same mapper) + independent per-sample bilinear gather.
    scales = [1.0 / strides[i] for i in filter_level]
    k_min = math.log2(strides[filter_level[0]])
    k_max = math.log2(strides[filter_level[-1]])
    boxes_all = jnp.concatenate(proposals, axis=0)
    levels = np.asarray(_map_levels(boxes_all, k_min, k_max))
    batch_all = np.concatenate([np.full((p.shape[0],), i, np.int32)
                                for i, p in enumerate(proposals)])
    boxes_np = np.asarray(boxes_all)
    n_roi = boxes_np.shape[0]

    ref = np.zeros((n_roi, num_c, output_size, output_size), np.float32)
    for r in range(n_roi):
        lvl = int(levels[r])
        b = int(batch_all[r])
        feat = np.asarray(xs[filter_level[lvl]][b])
        ref[r] = _roi_align_ref_np(feat, boxes_np[r], scales[lvl],
                                   output_size, sampling_ratio)

    assert out.shape == (n_roi, num_c, output_size, output_size)
    np.testing.assert_allclose(np.asarray(out), ref, atol=2e-2, rtol=2e-2)
    print("KERNEL_OK")
</pallas_src>

<mosaic_0001>
module attributes {stable_mosaic.version = 11 : i64} {
  func.func @_roi_align_kernel(%arg0: i32, %arg1: memref<8xi32, #tpu.memory_space<smem>>, %arg2: memref<1x4x64x64xf32, #tpu.memory_space<vmem>>, %arg3: memref<1x8x64xf32, #tpu.memory_space<vmem>>, %arg4: memref<1x64x8xf32, #tpu.memory_space<vmem>>, %arg5: memref<1x4x8x8xf32, #tpu.memory_space<vmem>>) attributes {dimension_semantics = [#tpu.dimension_semantics<parallel>], iteration_bounds = array<i64: 8>, scalar_prefetch = 1 : i64, scratch_operands = 0 : i64, tpu.core_type = #tpu.core_type<tc>, window_params = [{transform_indices = @transform_0, window_bounds = array<i64: 1, 4, 64, 64>}, {transform_indices = @transform_1, window_bounds = array<i64: 1, 8, 64>}, {transform_indices = @transform_2, window_bounds = array<i64: 1, 64, 8>}, {transform_indices = @transform_3, window_bounds = array<i64: 1, 4, 8, 8>}]} {
    %c0 = arith.constant 0 : index
    %c0_0 = arith.constant 0 : index
    %c0_1 = arith.constant 0 : index
    %c0_2 = arith.constant 0 : index
    %0 = vector.load %arg2[%c0, %c0_0, %c0_1, %c0_2] : memref<1x4x64x64xf32, #tpu.memory_space<vmem>>, vector<1x4x64x64xf32>
    %1 = vector.shape_cast %0 : vector<1x4x64x64xf32> to vector<4x64x64xf32>
    %c0_3 = arith.constant 0 : index
    %c0_4 = arith.constant 0 : index
    %c0_5 = arith.constant 0 : index
    %2 = vector.load %arg3[%c0_3, %c0_4, %c0_5] : memref<1x8x64xf32, #tpu.memory_space<vmem>>, vector<1x8x64xf32>
    %3 = vector.shape_cast %2 : vector<1x8x64xf32> to vector<8x64xf32>
    %c0_6 = arith.constant 0 : index
    %c0_7 = arith.constant 0 : index
    %c0_8 = arith.constant 0 : index
    %4 = vector.load %arg4[%c0_6, %c0_7, %c0_8] : memref<1x64x8xf32, #tpu.memory_space<vmem>>, vector<1x64x8xf32>
    %5 = vector.shape_cast %4 : vector<1x64x8xf32> to vector<64x8xf32>
    %6 = vector.shape_cast %1 : vector<4x64x64xf32> to vector<256x64xf32>
    %cst = arith.constant dense<0.000000e+00> : vector<256x8xf32>
    %7 = tpu.matmul %6, %5, %cst {dimension_numbers = #tpu.dot_dimension_numbers<[1], [0], [0], [1], [0, 0, 1, 1], [], []>} : vector<256x64xf32>, vector<64x8xf32>, vector<256x8xf32> -> vector<256x8xf32>
    %8 = vector.shape_cast %7 : vector<256x8xf32> to vector<4x64x8xf32>
    %9 = vector.shape_cast %3 : vector<8x64xf32> to vector<1x8x64xf32>
    %10 = vector.shape_cast %9 : vector<1x8x64xf32> to vector<1x8x64xf32>
    %11 = vector.broadcast %10 : vector<1x8x64xf32> to vector<4x8x64xf32>
    %cst_9 = arith.constant dense<0.000000e+00> : vector<4x8x8xf32>
    %12 = tpu.matmul %11, %8, %cst_9 {dimension_numbers = #tpu.dot_dimension_numbers<[2], [1], [1], [2], [0, 0, 0, 1, 1, 2], [0], [0]>} : vector<4x8x64xf32>, vector<4x64x8xf32>, vector<4x8x8xf32> -> vector<4x8x8xf32>
    %c0_10 = arith.constant 0 : index
    %c0_11 = arith.constant 0 : index
    %c0_12 = arith.constant 0 : index
    %c0_13 = arith.constant 0 : index
    %13 = vector.load %arg5[%c0_10, %c0_11, %c0_12, %c0_13] : memref<1x4x8x8xf32, #tpu.memory_space<vmem>>, vector<1x4x8x8xf32>
    %14 = vector.shape_cast %13 : vector<1x4x8x8xf32> to vector<4x8x8xf32>
    %15 = vector.shape_cast %12 : vector<4x8x8xf32> to vector<1x4x8x8xf32>
    tpu.vector_store %arg5[%c0_10, %c0_11, %c0_12, %c0_13], %15 {strides = array<i32>} : memref<1x4x8x8xf32, #tpu.memory_space<vmem>>, vector<1x4x8x8xf32>,
    return
  }
  func.func @transform_0(%arg0: i32, %arg1: memref<8xi32, #tpu.memory_space<smem>>) -> (i32, i32, i32, i32) {
    %0 = arith.index_cast %arg0 : i32 to index
    %1 = memref.load %arg1[%0] : memref<8xi32, #tpu.memory_space<smem>>
    %c0_i32 = arith.constant 0 : i32
    %c0_i32_0 = arith.constant 0 : i32
    %c0_i32_1 = arith.constant 0 : i32
    %c0_i32_2 = arith.constant 0 : i32
    return %1, %c0_i32, %c0_i32_0, %c0_i32_1 : i32, i32, i32, i32
  }
  func.func @transform_1(%arg0: i32, %arg1: memref<8xi32, #tpu.memory_space<smem>>) -> (i32, i32, i32) {
    %c0_i32 = arith.constant 0 : i32
    %c0_i32_0 = arith.constant 0 : i32
    %c0_i32_1 = arith.constant 0 : i32
    return %arg0, %c0_i32, %c0_i32_0 : i32, i32, i32
  }
  func.func @transform_2(%arg0: i32, %arg1: memref<8xi32, #tpu.memory_space<smem>>) -> (i32, i32, i32) {
    %c0_i32 = arith.constant 0 : i32
    %c0_i32_0 = arith.constant 0 : i32
    %c0_i32_1 = arith.constant 0 : i32
    return %arg0, %c0_i32, %c0_i32_0 : i32, i32, i32
  }
  func.func @transform_3(%arg0: i32, %arg1: memref<8xi32, #tpu.memory_space<smem>>) -> (i32, i32, i32, i32) {
    %c0_i32 = arith.constant 0 : i32
    %c0_i32_0 = arith.constant 0 : i32
    %c0_i32_1 = arith.constant 0 : i32
    %c0_i32_2 = arith.constant 0 : i32
    return %arg0, %c0_i32, %c0_i32_0, %c0_i32_1 : i32, i32, i32, i32
  }
}

</mosaic_0001>

<llo_original>
// kernel: tpu_custom_call.1
$region0: #{tpu_custom_call.1}
  #allocation0 [shape = 'u32[]', space=smem, size = 0x4, offset = 0x4, fixed_abs, tag = 'smem constant byte address 0x4 - core index']
  #allocation1 [shape = 'u32[72,128]{1,0:T(1,128)}', space=vmem, size = 0x9000, scoped, tag = 'internal scratch']
  #allocation2 [shape = 's32[1]{0}', space=sflag, size = 0x4, scoped, tag = 'scoped memory for tpu_custom_call.1']
  #allocation3 [shape = 'u8[512]{0}', space=smem, size = 0x200, scoped, tag = 'prefetched SMEM operand 0']
  %s0 = inlined_call_operand.vmem [shape: s32[8], index: 0, kind: input, shape index: {}]
  %s1 = inlined_call_operand.hbm [shape: f32[8,4,64,64], index: 1, kind: input, shape index: {}]
  %s2 = inlined_call_operand.vmem [shape: f32[8,8,64], index: 2, kind: input, shape index: {}]
  %s3 = inlined_call_operand.vmem [shape: f32[8,64,8], index: 3, kind: input, shape index: {}]
  %s4 = inlined_call_operand.hbm [shape: f32[8,4,8,8], index: 4, kind: output, shape index: {}]
  %s5 = sld [smem:[#allocation0]]
  $region49: #{tpu_custom_call.1} parent=0
    _
  %s7 = ssub.s32 1, %s5
  %s8 = scalar_select 0, %s7, %s5
  %s10 = sshll.u32 %s0, 4
  %s11 = int_to_ptr.vmem [resolvable:$true] %s10
  %13 = dma.vmem_to_smem %s11, 16, [#allocation3], [#allocation2]
  %15 = dma.done [#allocation2], 16
  %16 = sfence
  $region1: #{tpu_custom_call.1} parent=0
    #allocation4 [shape = 'u8[262144]{0}', space=vmem, size = 0x40000, scoped, tag = 'input window, operand 1']
    #allocation5 [shape = 's32[2]{0}', space=sflag, size = 0x8, scoped, tag = 'scoped memory for tpu_custom_call.1']
    #allocation6 [shape = 's32[2]{0}', space=sflag, size = 0x8, scoped, tag = 'scoped memory for tpu_custom_call.1']
    #allocation7 [shape = 'u8[32768]{0}', space=vmem, size = 0x8000, scoped, tag = 'output window, operand 0']
    %17 = vsyncpa [#allocation5], 0
    %s18 = scalar_lea.sflag [#allocation5], 1
    %19 = vsyncpa %s18, 0
    %20 = vsyncpa [#allocation6], 0
    %s21 = scalar_lea.sflag [#allocation6], 1
    %22 = vsyncpa %s21, 0
    loop: start=0, step=1, limit=10
    $region2: #{tpu_custom_call.1} parent=1 // loop_pre_header
      _
    $region3: #{tpu_custom_call.1} parent=1 // loop_header
      %s24 = sphi 0, %s28
      %p25 = scmp.ge.s32.totalorder %s24, 10
      %s36 = sphi 0, %s38
      %s39 = sphi 0, %s36
      %s40 = sphi 0, %s39
      %s56 = sphi 0, %s40
      %s62 = sphi 0, %s64
      %s65 = sphi 0, %s62
      %s66 = sphi 0, %s65
      %s82 = sphi 0, %s66
      %s88 = sphi 0, %s90
      %s91 = sphi 0, %s88
      %s92 = sphi 0, %s91
      %s108 = sphi 0, %s92
      %s114 = sphi 0, %s116
      %s117 = sphi 0, %s114
      %s118 = sphi 0, %s117
      %s134 = sphi 0, %s118
    $region4: #{tpu_custom_call.1} parent=1 // loop_header_branch
      %27 = sbr.rel (%p25) target = $region8
    $region5: #{tpu_custom_call.1} parent=1 // loop_body
      %s29 = ssub.s32 %s24, 1
      %s30 = ssub.s32 %s24, 2
      %s31 = sadd.s32 %s24, 1
      %s32 = sld [smem:[#allocation3 + %s24]]
      %s33 = sld [smem:[#allocation3 + %s31]]
      %s34 = ssub.s32 %s32, %s33
      %p35 = scmp.eq.s32.totalorder %s34, 0
      %s37 = sadd.s32 %s36, 1
      %s38 = scalar_select %p35, %s36, %s37
      %p41 = pneg %p35
      %p42 = scmp.eq.s32.totalorder %s24, 7
      %p43 = por %p41, %p42
      %p44 = scmp.ne.s32.totalorder %s36, %s39
      %p45 = scmp.eq.s32.totalorder %s24, 0
      %p46 = por %p44, %p45
      %p47 = scmp.ne.s32.totalorder %s36, %s39
      %p48 = scmp.eq.s32.totalorder %s29, 7
      %p49 = por %p47, %p48
      %p50 = scmp.ne.s32.totalorder %s39, %s40
      %p51 = scmp.eq.s32.totalorder %s29, 0
      %p52 = por %p50, %p51
      %p53 = scmp.ne.s32.totalorder %s39, %s40
      %p54 = scmp.eq.s32.totalorder %s30, 7
      %p55 = por %p53, %p54
      %p57 = scmp.ne.s32.totalorder %s40, %s56
      %p58 = scmp.eq.s32.totalorder %s30, 0
      %p59 = por %p57, %p58
      %s60 = ssub.s32 %s24, %s31
      %p61 = scmp.eq.s32.totalorder %s60, 0
      %s63 = sadd.s32 %s62, 1
      %s64 = scalar_select %p61, %s62, %s63
      %p67 = pneg %p61
      %p68 = scmp.eq.s32.totalorder %s24, 7
      %p69 = por %p67, %p68
      %p70 = scmp.ne.s32.totalorder %s62, %s65
      %p71 = scmp.eq.s32.totalorder %s24, 0
      %p72 = por %p70, %p71
      %p73 = scmp.ne.s32.totalorder %s62, %s65
      %p74 = scmp.eq.s32.totalorder %s29, 7
      %p75 = por %p73, %p74
      %p76 = scmp.ne.s32.totalorder %s65, %s66
      %p77 = scmp.eq.s32.totalorder %s29, 0
      %p78 = por %p76, %p77
      %p79 = scmp.ne.s32.totalorder %s65, %s66
      %p80 = scmp.eq.s32.totalorder %s30, 7
      %p81 = por %p79, %p80
      %p83 = scmp.ne.s32.totalorder %s66, %s82
      %p84 = scmp.eq.s32.totalorder %s30, 0
      %p85 = por %p83, %p84
      %s86 = ssub.s32 %s24, %s31
      %p87 = scmp.eq.s32.totalorder %s86, 0
      %s89 = sadd.s32 %s88, 1
      %s90 = scalar_select %p87, %s88, %s89
      %p93 = pneg %p87
      %p94 = scmp.eq.s32.totalorder %s24, 7
      %p95 = por %p93, %p94
      %p96 = scmp.ne.s32.totalorder %s88, %s91
      %p97 = scmp.eq.s32.totalorder %s24, 0
      %p98 = por %p96, %p97
      %p99 = scmp.ne.s32.totalorder %s88, %s91
      %p100 = scmp.eq.s32.totalorder %s29, 7
      %p101 = por %p99, %p100
      %p102 = scmp.ne.s32.totalorder %s91, %s92
      %p103 = scmp.eq.s32.totalorder %s29, 0
      %p104 = por %p102, %p103
      %p105 = scmp.ne.s32.totalorder %s91, %s92
      %p106 = scmp.eq.s32.totalorder %s30, 7
      %p107 = por %p105, %p106
      %p109 = scmp.ne.s32.totalorder %s92, %s108
      %p110 = scmp.eq.s32.totalorder %s30, 0
      %p111 = por %p109, %p110
      %s112 = ssub.s32 %s24, %s31
      %p113 = scmp.eq.s32.totalorder %s112, 0
      %s115 = sadd.s32 %s114, 1
      %s116 = scalar_select %p113, %s114, %s115
      %p119 = pneg %p113
      %p120 = scmp.eq.s32.totalorder %s24, 7
      %p121 = por %p119, %p120
      %p122 = scmp.ne.s32.totalorder %s114, %s117
      %p123 = scmp.eq.s32.totalorder %s24, 0
      %p124 = por %p122, %p123
      %p125 = scmp.ne.s32.totalorder %s114, %s117
      %p126 = scmp.eq.s32.totalorder %s29, 7
      %p127 = por %p125, %p126
      %p128 = scmp.ne.s32.totalorder %s117, %s118
      %p129 = scmp.eq.s32.totalorder %s29, 0
      %p130 = por %p128, %p129
      %p131 = scmp.ne.s32.totalorder %s117, %s118
      %p132 = scmp.eq.s32.totalorder %s30, 7
      %p133 = por %p131, %p132
      %p135 = scmp.ne.s32.totalorder %s118, %s134
      %p136 = scmp.eq.s32.totalorder %s30, 0
      %p137 = por %p135, %p136
      %p138 = scmp.le.s32.totalorder 1, %s24
      %p139 = scmp.lt.s32.totalorder %s24, 9
      %p140 = pnand %p138, %p139
      %p141 = pneg %p140
      // Predicated region
      $region9: #{tpu_custom_call.1} parent=5 // pred_check
        _
      $region10: #{tpu_custom_call.1} parent=5 // pred_check_branch
        %143 = sbr.rel (%p140) target = $region12
      $region11: #{tpu_custom_call.1} parent=5 // pred_region
        %s144 = ssub.s32 %s24, 1
      $region12: #{tpu_custom_call.1} parent=5 // pred_fallthru
        _
      %p145 = scmp.lt.s32.totalorder %s24, 8
      // Predicated region
      $region13: #{tpu_custom_call.1} parent=5 // pred_check
        %p146 = pneg %p145
      $region14: #{tpu_custom_call.1} parent=5 // pred_check_branch
        %148 = sbr.rel (%p146) target = $region16
      $region15: #{tpu_custom_call.1} parent=5 // pred_region
        // Predicated region
        $region17: #{tpu_custom_call.1} parent=15 // pred_check
          %p149 = pneg %p46
        $region18: #{tpu_custom_call.1} parent=15 // pred_check_branch
          %151 = sbr.rel (%p149) target = $region20
        $region19: #{tpu_custom_call.1} parent=15 // pred_region
          %s152 = sand.u32 %s36, 1
          %s153 = scalar_lea.sflag [#allocation5], %s152
          %s154 = sand.u32 %s36, 1
          %s155 = smul.addr %s154, 256
          %s156 = scalar_lea.vmem [#allocation4], %s155
          %s157 = sld [smem:[#allocation3 + %s24]]
          %159 = vsyncadd %s153, 0
          %s160 = smul.addr %s157, 32
          %s161 = smul.addr %s160, 8
          %s162 = scalar_lea.hbm %s1, %s161
          %s163 = sshll.u32 %s162, 4
          %s164 = int_to_ptr.hbm [resolvable:$true] %s163
          %s165 = sshll.u32 %s156, 4
          %s166 = int_to_ptr.vmem [resolvable:$true] %s165
          %171 = dma.hbm_to_vmem [thread:$0]  %s164, 4096, %s166, %s153, 128, 128, 8
        $region20: #{tpu_custom_call.1} parent=15 // pred_fallthru
          _
        // Predicated region
        $region21: #{tpu_custom_call.1} parent=15 // pred_check
          %p172 = pneg %p72
        $region22: #{tpu_custom_call.1} parent=15 // pred_check_branch
          %174 = sbr.rel (%p172) target = $region24
        $region23: #{tpu_custom_call.1} parent=15 // pred_region
          %p175 = scmp.lt.s32.totalorder %s24, 7
          %s176 = scalar_select %p175, %s24, 7
          %s177 = smul.addr %s176, 8
          %s178 = scalar_lea.vmem %s2, %s177
        $region24: #{tpu_custom_call.1} parent=15 // pred_fallthru
          _
        // Predicated region
        $region25: #{tpu_custom_call.1} parent=15 // pred_check
          %p179 = pneg %p98
        $region26: #{tpu_custom_call.1} parent=15 // pred_check_branch
          %181 = sbr.rel (%p179) target = $region28
        $region27: #{tpu_custom_call.1} parent=15 // pred_region
          %p182 = scmp.lt.s32.totalorder %s24, 7
          %s183 = scalar_select %p182, %s24, 7
          %s184 = smul.addr %s183, 8
          %s185 = smul.addr %s184, 8
          %s186 = scalar_lea.vmem %s3, %s185
        $region28: #{tpu_custom_call.1} parent=15 // pred_fallthru
          _
      $region16: #{tpu_custom_call.1} parent=5 // pred_fallthru
        _
      %p187 = scmp.le.s32.totalorder 1, %s24
      %p188 = scmp.lt.s32.totalorder %s24, 9
      %p189 = pnand %p187, %p188
      %p190 = pneg %p189
      // Predicated region
      $region29: #{tpu_custom_call.1} parent=5 // pred_check
        _
      $region30: #{tpu_custom_call.1} parent=5 // pred_check_branch
        %192 = sbr.rel (%p189) target = $region32
      $region31: #{tpu_custom_call.1} parent=5 // pred_region
        %s193 = ssub.s32 %s24, 1
        %s194 = sand.u32 %s39, 1
        %s195 = scalar_lea.sflag [#allocation5], %s194
        %s196 = sand.u32 %s39, 1
        %s197 = smul.addr %s196, 256
        %s198 = scalar_lea.vmem [#allocation4], %s197
        // Predicated region
        $region33: #{tpu_custom_call.1} parent=31 // pred_check
          %p199 = pneg %p52
        $region34: #{tpu_custom_call.1} parent=31 // pred_check_branch
          %201 = sbr.rel (%p199) target = $region36
        $region35: #{tpu_custom_call.1} parent=31 // pred_region
          %203 = dma.done %s195, 4096
        $region36: #{tpu_custom_call.1} parent=31 // pred_fallthru
          _
        %s204 = sand.u32 %s39, 1
        %s205 = scalar_lea.sflag [#allocation5], %s204
        %s206 = sand.u32 %s39, 1
        %s207 = smul.addr %s206, 256
        %s208 = scalar_lea.vmem [#allocation4], %s207
        %p209 = pneg %p52
        %p210 = pneg %p49
        %p211 = scmp.lt.s32.totalorder %s29, 7
        %s212 = scalar_select %p211, %s29, 7
        %s213 = smul.addr %s212, 8
        %s214 = scalar_lea.vmem %s2, %s213
        %p215 = pneg %p78
        %p216 = pneg %p75
        %p217 = scmp.lt.s32.totalorder %s29, 7
        %s218 = scalar_select %p217, %s29, 7
        %s219 = smul.addr %s218, 8
        %s220 = smul.addr %s219, 8
        %s221 = scalar_lea.vmem %s3, %s220
        %p222 = pneg %p104
        %p223 = pneg %p101
        %p224 = pneg %p130
        %p225 = pneg %p127
        %s226 = sand.u32 %s117, 1
        %s227 = scalar_lea.sflag [#allocation6], %s226
        %s228 = sand.u32 %s117, 1
        %s229 = smul.addr %s228, 32
        %s230 = scalar_lea.vmem [#allocation7], %s229
        %s231 = sld [smem:[#allocation3 + %s29]]
        %p232 = scmp.lt.s32.totalorder %s29, 7
        %s233 = scalar_select %p232, %s29, 7
        %s234 = smul.addr %s233, 8
        %s235 = scalar_lea.vmem %s2, %s234
        %p236 = scmp.lt.s32.totalorder %s29, 7
        %s237 = scalar_select %p236, %s29, 7
        %s238 = smul.addr %s237, 8
        %s239 = smul.addr %s238, 8
        %s240 = scalar_lea.vmem %s3, %s239
        %v241 = vld [vmem:[%s198] sm:$0xff]
        %v242 = vld [vmem:[%s198 + $0x8] sm:$0xff]
        %v243 = vld [vmem:[%s198 + $0x10] sm:$0xff]
        %v244 = vld [vmem:[%s198 + $0x18] sm:$0xff]
        %v245 = vld [vmem:[%s198 + $0x20] sm:$0xff]
        %v246 = vld [vmem:[%s198 + $0x28] sm:$0xff]
        %v247 = vld [vmem:[%s198 + $0x30] sm:$0xff]
        %v248 = vld [vmem:[%s198 + $0x38] sm:$0xff]
        %v249 = vld [vmem:[%s198 + $0x40] sm:$0xff]
        %v250 = vld [vmem:[%s198 + $0x48] sm:$0xff]
        %v251 = vld [vmem:[%s198 + $0x50] sm:$0xff]
        %v252 = vld [vmem:[%s198 + $0x58] sm:$0xff]
        %v253 = vld [vmem:[%s198 + $0x60] sm:$0xff]
        %v254 = vld [vmem:[%s198 + $0x68] sm:$0xff]
        %v255 = vld [vmem:[%s198 + $0x70] sm:$0xff]
        %v256 = vld [vmem:[%s198 + $0x78] sm:$0xff]
        %v257 = vld [vmem:[%s198 + $0x80] sm:$0xff]
        %v258 = vld [vmem:[%s198 + $0x88] sm:$0xff]
        %v259 = vld [vmem:[%s198 + $0x90] sm:$0xff]
        %v260 = vld [vmem:[%s198 + $0x98] sm:$0xff]
        %v261 = vld [vmem:[%s198 + $0xa0] sm:$0xff]
        %v262 = vld [vmem:[%s198 + $0xa8] sm:$0xff]
        %v263 = vld [vmem:[%s198 + $0xb0] sm:$0xff]
        %v264 = vld [vmem:[%s198 + $0xb8] sm:$0xff]
        %v265 = vld [vmem:[%s198 + $0xc0] sm:$0xff]
        %v266 = vld [vmem:[%s198 + $0xc8] sm:$0xff]
        %v267 = vld [vmem:[%s198 + $0xd0] sm:$0xff]
        %v268 = vld [vmem:[%s198 + $0xd8] sm:$0xff]
        %v269 = vld [vmem:[%s198 + $0xe0] sm:$0xff]
        %v270 = vld [vmem:[%s198 + $0xe8] sm:$0xff]
        %v271 = vld [vmem:[%s198 + $0xf0] sm:$0xff]
        %v272 = vld [vmem:[%s198 + $0xf8] sm:$0xff]
        %v273 = vld [vmem:[%s235] sm:$0xff]
        %v274 = vld [vmem:[%s240] sm:$0xff]
        %v275 = vld [vmem:[%s240 + $0x8] sm:$0xff]
        %v276 = vld [vmem:[%s240 + $0x10] sm:$0xff]
        %v277 = vld [vmem:[%s240 + $0x18] sm:$0xff]
        %v278 = vld [vmem:[%s240 + $0x20] sm:$0xff]
        %v279 = vld [vmem:[%s240 + $0x28] sm:$0xff]
        %v280 = vld [vmem:[%s240 + $0x30] sm:$0xff]
        %v281 = vld [vmem:[%s240 + $0x38] sm:$0xff]
        %vm282 = vcmask 523264
        %v284 = vsel %vm282, %v241, 0
        %v287 = vsel %vm282, %v242, 0
        %v290 = vsel %vm282, %v243, 0
        %v293 = vsel %vm282, %v244, 0
        %v296 = vsel %vm282, %v245, 0
        %v299 = vsel %vm282, %v246, 0
        %v302 = vsel %vm282, %v247, 0
        %v305 = vsel %vm282, %v248, 0
        %v308 = vsel %vm282, %v249, 0
        %v311 = vsel %vm282, %v250, 0
        %v314 = vsel %vm282, %v251, 0
        %v317 = vsel %vm282, %v252, 0
        %v320 = vsel %vm282, %v253, 0
        %v323 = vsel %vm282, %v254, 0
        %v326 = vsel %vm282, %v255, 0
        %v329 = vsel %vm282, %v256, 0
        %v332 = vsel %vm282, %v257, 0
        %v335 = vsel %vm282, %v258, 0
        %v338 = vsel %vm282, %v259, 0
        %v341 = vsel %vm282, %v260, 0
        %v344 = vsel %vm282, %v261, 0
        %v347 = vsel %vm282, %v262, 0
        %v350 = vsel %vm282, %v263, 0
        %v353 = vsel %vm282, %v264, 0
        %v356 = vsel %vm282, %v265, 0
        %v359 = vsel %vm282, %v266, 0
        %v362 = vsel %vm282, %v267, 0
        %v365 = vsel %vm282, %v268, 0
        %v368 = vsel %vm282, %v269, 0
        %v371 = vsel %vm282, %v270, 0
        %v374 = vsel %vm282, %v271, 0
        %v377 = vsel %vm282, %v272, 0
        %379 = vmatpush.msra.mxu0 0.0
        %380 = vmatpush.msra.mxu0 0.0
        %381 = vmatpush.msra.mxu0 0.0
        %382 = vmatpush.msra.mxu0 0.0
        %383 = vmatpush.msra.mxu0 0.0
        %384 = vmatpush.msra.mxu0 0.0
        %385 = vmatpush.msra.mxu0 0.0
        %386 = vmatpush.msra.mxu0 0.0
        %387 = vmatpush.msra.mxu0 %v281
        %388 = vmatpush.msra.mxu0 %v280
        %389 = vmatpush.msra.mxu0 %v279
        %390 = vmatpush.msra.mxu0 %v278
        %391 = vmatpush.msra.mxu0 %v277
        %392 = vmatpush.msra.mxu0 %v276
        %393 = vmatpush.msra.mxu0 %v275
        %394 = vmatpush.msra.mxu0 %v274
        %395 = vmatmul.f32.gmra.mxu0 %v284
        %v396 = vpop.f32.mrf.mxu0
        %v397 = vadd.f32 0.0, %v396
        %398 = vmatmul.f32.gmra.mxu0 %v287
        %v399 = vpop.f32.mrf.mxu0
        %v400 = vadd.f32 0.0, %v399
        %401 = vmatmul.f32.gmra.mxu0 %v290
        %v402 = vpop.f32.mrf.mxu0
        %v403 = vadd.f32 0.0, %v402
        %404 = vmatmul.f32.gmra.mxu0 %v293
        %v405 = vpop.f32.mrf.mxu0
        %v406 = vadd.f32 0.0, %v405
        %407 = vmatmul.f32.gmra.mxu0 %v296
        %v408 = vpop.f32.mrf.mxu0
        %v409 = vadd.f32 0.0, %v408
        %410 = vmatmul.f32.gmra.mxu0 %v299
        %v411 = vpop.f32.mrf.mxu0
        %v412 = vadd.f32 0.0, %v411
        %413 = vmatmul.f32.gmra.mxu0 %v302
        %v414 = vpop.f32.mrf.mxu0
        %v415 = vadd.f32 0.0, %v414
        %416 = vmatmul.f32.gmra.mxu0 %v305
        %v417 = vpop.f32.mrf.mxu0
        %v418 = vadd.f32 0.0, %v417
        %419 = vmatmul.f32.gmra.mxu0 %v308
        %v420 = vpop.f32.mrf.mxu0
        %v421 = vadd.f32 0.0, %v420
        %422 = vmatmul.f32.gmra.mxu0 %v311
        %v423 = vpop.f32.mrf.mxu0
        %v424 = vadd.f32 0.0, %v423
        %425 = vmatmul.f32.gmra.mxu0 %v314
        %v426 = vpop.f32.mrf.mxu0
        %v427 = vadd.f32 0.0, %v426
        %428 = vmatmul.f32.gmra.mxu0 %v317
        %v429 = vpop.f32.mrf.mxu0
        %v430 = vadd.f32 0.0, %v429
        %431 = vmatmul.f32.gmra.mxu0 %v320
        %v432 = vpop.f32.mrf.mxu0
        %v433 = vadd.f32 0.0, %v432
        %434 = vmatmul.f32.gmra.mxu0 %v323
        %v435 = vpop.f32.mrf.mxu0
        %v436 = vadd.f32 0.0, %v435
        %437 = vmatmul.f32.gmra.mxu0 %v326
        %v438 = vpop.f32.mrf.mxu0
        %v439 = vadd.f32 0.0, %v438
        %440 = vmatmul.f32.gmra.mxu0 %v329
        %v441 = vpop.f32.mrf.mxu0
        %v442 = vadd.f32 0.0, %v441
        %443 = vmatmul.f32.gmra.mxu0 %v332
        %v444 = vpop.f32.mrf.mxu0
        %v445 = vadd.f32 0.0, %v444
        %446 = vmatmul.f32.gmra.mxu0 %v335
        %v447 = vpop.f32.mrf.mxu0
        %v448 = vadd.f32 0.0, %v447
        %449 = vmatmul.f32.gmra.mxu0 %v338
        %v450 = vpop.f32.mrf.mxu0
        %v451 = vadd.f32 0.0, %v450
        %452 = vmatmul.f32.gmra.mxu0 %v341
        %v453 = vpop.f32.mrf.mxu0
        %v454 = vadd.f32 0.0, %v453
        %455 = vmatmul.f32.gmra.mxu0 %v344
        %v456 = vpop.f32.mrf.mxu0
        %v457 = vadd.f32 0.0, %v456
        %458 = vmatmul.f32.gmra.mxu0 %v347
        %v459 = vpop.f32.mrf.mxu0
        %v460 = vadd.f32 0.0, %v459
        %461 = vmatmul.f32.gmra.mxu0 %v350
        %v462 = vpop.f32.mrf.mxu0
        %v463 = vadd.f32 0.0, %v462
        %464 = vmatmul.f32.gmra.mxu0 %v353
        %v465 = vpop.f32.mrf.mxu0
        %v466 = vadd.f32 0.0, %v465
        %467 = vmatmul.f32.gmra.mxu0 %v356
        %v468 = vpop.f32.mrf.mxu0
        %v469 = vadd.f32 0.0, %v468
        %470 = vmatmul.f32.gmra.mxu0 %v359
        %v471 = vpop.f32.mrf.mxu0
        %v472 = vadd.f32 0.0, %v471
        %473 = vmatmul.f32.gmra.mxu0 %v362
        %v474 = vpop.f32.mrf.mxu0
        %v475 = vadd.f32 0.0, %v474
        %476 = vmatmul.f32.gmra.mxu0 %v365
        %v477 = vpop.f32.mrf.mxu0
        %v478 = vadd.f32 0.0, %v477
        %479 = vmatmul.f32.gmra.mxu0 %v368
        %v480 = vpop.f32.mrf.mxu0
        %v481 = vadd.f32 0.0, %v480
        %482 = vmatmul.f32.gmra.mxu0 %v371
        %v483 = vpop.f32.mrf.mxu0
        %v484 = vadd.f32 0.0, %v483
        %485 = vmatmul.f32.gmra.mxu0 %v374
        %v486 = vpop.f32.mrf.mxu0
        %v487 = vadd.f32 0.0, %v486
        %488 = vmatmul.f32.gmra.mxu0 %v377
        %v489 = vpop.f32.mrf.mxu0
        %v490 = vadd.f32 0.0, %v489
        %491 = vdwg.mxu0
        %v493 = vsel %vm282, %v273, 0
        %495 = vmatpush.msra.mxu0 0.0
        %496 = vmatpush.msra.mxu0 0.0
        %497 = vmatpush.msra.mxu0 0.0
        %498 = vmatpush.msra.mxu0 0.0
        %499 = vmatpush.msra.mxu0 0.0
        %500 = vmatpush.msra.mxu0 0.0
        %501 = vmatpush.msra.mxu0 0.0
        %502 = vmatpush.msra.mxu0 0.0
        %503 = vmatpush.msra.mxu0 %v418
        %504 = vmatpush.msra.mxu0 %v415
        %505 = vmatpush.msra.mxu0 %v412
        %506 = vmatpush.msra.mxu0 %v409
        %507 = vmatpush.msra.mxu0 %v406
        %508 = vmatpush.msra.mxu0 %v403
        %509 = vmatpush.msra.mxu0 %v400
        %510 = vmatpush.msra.mxu0 %v397
        %511 = vmatmul.f32.gmra.mxu0 %v493
        %v512 = vpop.f32.mrf.mxu0
        %v513 = vadd.f32 0.0, %v512
        %514 = vdwg.mxu0
        %515 = vmatpush.msra.mxu0 0.0
        %516 = vmatpush.msra.mxu0 0.0
        %517 = vmatpush.msra.mxu0 0.0
        %518 = vmatpush.msra.mxu0 0.0
        %519 = vmatpush.msra.mxu0 0.0
        %520 = vmatpush.msra.mxu0 0.0
        %521 = vmatpush.msra.mxu0 0.0
        %522 = vmatpush.msra.mxu0 0.0
        %523 = vmatpush.msra.mxu0 %v442
        %524 = vmatpush.msra.mxu0 %v439
        %525 = vmatpush.msra.mxu0 %v436
        %526 = vmatpush.msra.mxu0 %v433
        %527 = vmatpush.msra.mxu0 %v430
        %528 = vmatpush.msra.mxu0 %v427
        %529 = vmatpush.msra.mxu0 %v424
        %530 = vmatpush.msra.mxu0 %v421
        %531 = vmatmul.f32.gmra.mxu0 %v493
        %v532 = vpop.f32.mrf.mxu0
        %v533 = vadd.f32 0.0, %v532
        %534 = vdwg.mxu0
        %535 = vmatpush.msra.mxu0 0.0
        %536 = vmatpush.msra.mxu0 0.0
        %537 = vmatpush.msra.mxu0 0.0
        %538 = vmatpush.msra.mxu0 0.0
        %539 = vmatpush.msra.mxu0 0.0
        %540 = vmatpush.msra.mxu0 0.0
        %541 = vmatpush.msra.mxu0 0.0
        %542 = vmatpush.msra.mxu0 0.0
        %543 = vmatpush.msra.mxu0 %v466
        %544 = vmatpush.msra.mxu0 %v463
        %545 = vmatpush.msra.mxu0 %v460
        %546 = vmatpush.msra.mxu0 %v457
        %547 = vmatpush.msra.mxu0 %v454
        %548 = vmatpush.msra.mxu0 %v451
        %549 = vmatpush.msra.mxu0 %v448
        %550 = vmatpush.msra.mxu0 %v445
        %551 = vmatmul.f32.gmra.mxu0 %v493
        %v552 = vpop.f32.mrf.mxu0
        %v553 = vadd.f32 0.0, %v552
        %554 = vdwg.mxu0
        %555 = vmatpush.msra.mxu0 0.0
        %556 = vmatpush.msra.mxu0 0.0
        %557 = vmatpush.msra.mxu0 0.0
        %558 = vmatpush.msra.mxu0 0.0
        %559 = vmatpush.msra.mxu0 0.0
        %560 = vmatpush.msra.mxu0 0.0
        %561 = vmatpush.msra.mxu0 0.0
        %562 = vmatpush.msra.mxu0 0.0
        %563 = vmatpush.msra.mxu0 %v490
        %564 = vmatpush.msra.mxu0 %v487
        %565 = vmatpush.msra.mxu0 %v484
        %566 = vmatpush.msra.mxu0 %v481
        %567 = vmatpush.msra.mxu0 %v478
        %568 = vmatpush.msra.mxu0 %v475
        %569 = vmatpush.msra.mxu0 %v472
        %570 = vmatpush.msra.mxu0 %v469
        %571 = vmatmul.f32.gmra.mxu0 %v493
        %v572 = vpop.f32.mrf.mxu0
        %v573 = vadd.f32 0.0, %v572
        %574 = vdwg.mxu0
        %vm575 = vcmask 64512
        %576 = vst.msk [vmem:[%s230] sm:$0xff] %vm575, %v513
        %577 = vst.msk [vmem:[%s230 + $0x8] sm:$0xff] %vm575, %v533
        %578 = vst.msk [vmem:[%s230 + $0x10] sm:$0xff] %vm575, %v553
        %579 = vst.msk [vmem:[%s230 + $0x18] sm:$0xff] %vm575, %v573
        %s580 = sand.u32 %s117, 1
        %s581 = scalar_lea.sflag [#allocation6], %s580
        %s582 = sand.u32 %s117, 1
        %s583 = smul.addr %s582, 32
        %s584 = scalar_lea.vmem [#allocation7], %s583
        // Predicated region
        $region37: #{tpu_custom_call.1} parent=31 // pred_check
          %p585 = pneg %p127
        $region38: #{tpu_custom_call.1} parent=31 // pred_check_branch
          %587 = sbr.rel (%p585) target = $region40
        $region39: #{tpu_custom_call.1} parent=31 // pred_region
          %589 = vsyncadd %s581, 0
          %s590 = smul.addr %s29, 4
          %s591 = smul.addr %s590, 8
          %s592 = scalar_lea.hbm %s4, %s591
          %s593 = sshll.u32 %s584, 4
          %s594 = int_to_ptr.vmem [resolvable:$true] %s593
          %s595 = sshll.u32 %s592, 4
          %s596 = int_to_ptr.hbm [resolvable:$true] %s595
          %601 = dma.vmem_to_hbm [thread:$0]  %s594, 512, %s596, %s581, 128, 128, 8
        $region40: #{tpu_custom_call.1} parent=31 // pred_fallthru
          _
      $region32: #{tpu_custom_call.1} parent=5 // pred_fallthru
        _
      %p602 = scmp.le.s32.totalorder 2, %s24
      // Predicated region
      $region41: #{tpu_custom_call.1} parent=5 // pred_check
        %p603 = pneg %p602
      $region42: #{tpu_custom_call.1} parent=5 // pred_check_branch
        %605 = sbr.rel (%p603) target = $region44
      $region43: #{tpu_custom_call.1} parent=5 // pred_region
        %s606 = ssub.s32 %s24, 2
        // Predicated region
        $region45: #{tpu_custom_call.1} parent=43 // pred_check
          %p607 = pneg %p133
        $region46: #{tpu_custom_call.1} parent=43 // pred_check_branch
          %609 = sbr.rel (%p607) target = $region48
        $region47: #{tpu_custom_call.1} parent=43 // pred_region
          %s610 = sand.u32 %s118, 1
          %s611 = scalar_lea.sflag [#allocation6], %s610
          %s612 = sand.u32 %s118, 1
          %s613 = smul.addr %s612, 32
          %s614 = scalar_lea.vmem [#allocation7], %s613
          %616 = dma.done %s611, 512
        $region48: #{tpu_custom_call.1} parent=43 // pred_fallthru
          _
      $region44: #{tpu_custom_call.1} parent=5 // pred_fallthru
        _
    $region6: #{tpu_custom_call.1} parent=1 // loop_footer
      %s28 = sadd.s32 1, %s24
    $region7: #{tpu_custom_call.1} parent=1 // loop_footer_branch
      %23 = sbr.rel target = $region3
    $region8: #{tpu_custom_call.1} parent=1 // loop_exit
      _
    %617 = vsyncpa [#allocation5], 1
    %s618 = scalar_lea.sflag [#allocation5], 1
    %619 = vsyncpa %s618, 1
    %620 = vsyncpa [#allocation6], 1
    %s621 = scalar_lea.sflag [#allocation6], 1
    %622 = vsyncpa %s621, 1

</llo_original>
